<compile_context>
chip_gen: v5e
topology: v5e:2x2
jax: 0.10.0
libtpu: 0.0.40
codegen_flags: <defaults>
</compile_context>

<pallas_src>
import functools

import jax
import jax.numpy as jnp
from jax.experimental import pallas as pl
from jax.experimental.pallas import tpu as pltpu

LANE = 128


def _round_up(n, m):
    return ((n + m - 1) // m) * m


def _pad2(x, rows=None, cols=None):
    """Zero-pad a 2-D array up to (rows, cols)."""
    r = x.shape[0] if rows is None else rows
    c = x.shape[1] if cols is None else cols
    return jnp.pad(x, ((0, r - x.shape[0]), (0, c - x.shape[1])))


def _static_net_kernel(x_ref,
                       we_ref, be_ref,
                       w1a_ref, w1b_ref, b1_ref,
                       w2_ref, b2_ref,
                       w3_ref, b3_ref,
                       w4_ref, b4_ref,
                       out_ref, *, enc_in, static_dim):
    f32 = jnp.float32
    cdt = we_ref.dtype  # MXU compute dtype (f32 or bf16); accumulation is always f32.

    x = x_ref[...]                              # (tile_b, enc_in + static_dim)
    xe = x[:, :enc_in]                          # encoder input  [initial | ctrl_flat]
    xs = x[:, enc_in:enc_in + static_dim]       # static features

    # Encoder: single fused dot over [initial | ctrl_flat]  (K = initial_dim + S*C).
    feat = jnp.dot(xe, we_ref[...], preferred_element_type=f32) + be_ref[...]
    feat = jnp.maximum(feat, 0.0)

    # FinalNonlinear layer 1: concat([feat, static]) @ W1 expressed as split dots.
    h = jnp.dot(feat.astype(cdt), w1a_ref[...], preferred_element_type=f32)
    h = h + jnp.dot(xs, w1b_ref[...], preferred_element_type=f32)
    h = jnp.maximum(h + b1_ref[...], 0.0)

    # Two hidden Linear(hidden, hidden) layers (num_layers = 3).
    h = jnp.maximum(jnp.dot(h.astype(cdt), w2_ref[...], preferred_element_type=f32)
                    + b2_ref[...], 0.0)
    h = jnp.maximum(jnp.dot(h.astype(cdt), w3_ref[...], preferred_element_type=f32)
                    + b3_ref[...], 0.0)

    # Output projection (no final activation); stored at the true (unpadded) width.
    out_ref[...] = (jnp.dot(h.astype(cdt), w4_ref[...], preferred_element_type=f32)
                    + b4_ref[...]).astype(out_ref.dtype)


def prepare_params(params, compute_dtype=jnp.bfloat16):
    """One-time weight prep: fold encoder split, zero-pad internal dims to lane multiples,
    cast matmul operands to the MXU compute dtype.  Call once, reuse across forwards."""
    feat_dim = params["wi"].shape[1]
    hidden_dim = params["w2"].shape[1]
    out_dim = params["w4"].shape[1]

    feat_p = _round_up(feat_dim, LANE)
    hid_p = _round_up(hidden_dim, LANE)

    cdt = compute_dtype
    prepped = {
        # encoder ([initial | ctrl_flat] -> feat), columns padded to lane multiple
        "we":  _pad2(jnp.concatenate([params["wi"], params["wc"]], axis=0), cols=feat_p).astype(cdt),
        "be":  _pad2(params["be"], cols=feat_p).astype(jnp.float32),
        # layer 1 split: feat part (rows padded to feat_p) and static part
        "w1a": _pad2(params["w1a"], rows=feat_p, cols=hid_p).astype(cdt),
        "w1b": _pad2(params["w1b"], cols=hid_p).astype(cdt),
        "b1":  _pad2(params["b1"], cols=hid_p).astype(jnp.float32),
        # hidden layers
        "w2":  _pad2(params["w2"], rows=hid_p, cols=hid_p).astype(cdt),
        "b2":  _pad2(params["b2"], cols=hid_p).astype(jnp.float32),
        "w3":  _pad2(params["w3"], rows=hid_p, cols=hid_p).astype(cdt),
        "b3":  _pad2(params["b3"], cols=hid_p).astype(jnp.float32),
        # output projection: rows padded (hidden), columns left at the TRUE out_dim
        "w4":  _pad2(params["w4"], rows=hid_p).astype(cdt),
        "b4":  params["b4"].astype(jnp.float32),
    }
    return prepped


@functools.partial(jax.jit, static_argnames=("tile_b",))
def static_data_network(initial, controls, static, prepped, *, tile_b=2048):
    """Forward pass of StaticDataNetwork. Glue (flatten/concat) in JAX, compute in Pallas."""
    B = initial.shape[0]
    cdt = prepped["we"].dtype
    enc_in = prepped["we"].shape[0]
    static_dim = prepped["w1b"].shape[0]
    out_dim = prepped["w4"].shape[1]

    # Single merged activation input: [initial | ctrl_flat | static]  (one DMA stream).
    x = jnp.concatenate([initial, controls.reshape(B, -1), static], axis=1).astype(cdt)
    in_total = x.shape[1]

    # --- batch tiling -----------------------------------------------------------------
    tile_b = max(8, (tile_b // 8) * 8)          # multiple of 8 (sublane)
    b8 = _round_up(B, 8)
    tile_b = min(tile_b, b8)
    if b8 >= 16:
        # keep >= 2 grid steps so both v7x TensorCores get work under "parallel"
        tile_b = min(tile_b, _round_up((b8 + 1) // 2, 8))
    b_pad = _round_up(B, tile_b)
    x = _pad2(x, rows=b_pad)

    grid = (pl.cdiv(b_pad, tile_b),)

    res_spec = lambda w: pl.BlockSpec(w.shape, lambda i: (0, 0))   # VMEM-resident weights
    weights = (prepped["we"], prepped["be"],
               prepped["w1a"], prepped["w1b"], prepped["b1"],
               prepped["w2"], prepped["b2"],
               prepped["w3"], prepped["b3"],
               prepped["w4"], prepped["b4"])

    in_specs = ([pl.BlockSpec((tile_b, in_total), lambda i: (i, 0))]
                + [res_spec(w) for w in weights])

    out = pl.pallas_call(
        functools.partial(_static_net_kernel, enc_in=enc_in, static_dim=static_dim),
        out_shape=jax.ShapeDtypeStruct((b_pad, out_dim), jnp.float32),
        grid=grid,
        in_specs=in_specs,
        out_specs=pl.BlockSpec((tile_b, out_dim), lambda i: (i, 0)),
        compiler_params=pltpu.CompilerParams(
            # batch axis shards across TensorCores (v7x); footprint is tiny so the
            # default scoped VMEM limit is plenty on every generation.
            dimension_semantics=("parallel",),
        ),
    )(x, *weights)

    return out[:B]   # cheap row-only slice (columns already at true width)


def _reference(initial, controls, static, params):
    """Pure-JAX reference of the same forward pass."""
    B = initial.shape[0]
    ctrl_flat = controls.reshape(B, -1)
    feat = jnp.maximum(initial @ params["wi"] + ctrl_flat @ params["wc"] + params["be"], 0.0)
    z = jnp.concatenate([feat, static], axis=1)
    w1 = jnp.concatenate([params["w1a"], params["w1b"]], axis=0)
    h = jnp.maximum(z @ w1 + params["b1"], 0.0)
    h = jnp.maximum(h @ params["w2"] + params["b2"], 0.0)
    h = jnp.maximum(h @ params["w3"] + params["b3"], 0.0)
    return h @ params["w4"] + params["b4"]


def init_params(key, initial_dim, seq, control_dim, feat_dim, static_dim, hidden_dim, output_dim):
    """Deterministic parameter init (synthetic; mirrors the PyTorch module's shapes)."""
    ks = jax.random.split(key, 12)
    scale = 0.1
    return {
        # base-model encoder ([initial | ctrl_flat] -> feat_dim), split into two blocks
        "wi":  scale * jax.random.normal(ks[0], (initial_dim, feat_dim), jnp.float32),
        "wc":  scale * jax.random.normal(ks[1], (seq * control_dim, feat_dim), jnp.float32),
        "be":  scale * jax.random.normal(ks[2], (1, feat_dim), jnp.float32),
        # FinalNonlinear: Linear(feat_dim + static_dim, hidden_dim), split into two blocks
        "w1a": scale * jax.random.normal(ks[3], (feat_dim, hidden_dim), jnp.float32),
        "w1b": scale * jax.random.normal(ks[4], (static_dim, hidden_dim), jnp.float32),
        "b1":  scale * jax.random.normal(ks[5], (1, hidden_dim), jnp.float32),
        # two hidden Linear(hidden, hidden) layers (num_layers=3)
        "w2":  scale * jax.random.normal(ks[6], (hidden_dim, hidden_dim), jnp.float32),
        "b2":  scale * jax.random.normal(ks[7], (1, hidden_dim), jnp.float32),
        "w3":  scale * jax.random.normal(ks[8], (hidden_dim, hidden_dim), jnp.float32),
        "b3":  scale * jax.random.normal(ks[9], (1, hidden_dim), jnp.float32),
        # output Linear(hidden, output_dim)
        "w4":  scale * jax.random.normal(ks[10], (hidden_dim, output_dim), jnp.float32),
        "b4":  scale * jax.random.normal(ks[11], (1, output_dim), jnp.float32),
    }


if __name__ == "__main__":
    initial_dim, seq, control_dim = 16, 8, 4
    feat_dim = 32          # base model's final_linear.in_features
    static_dim = 8
    hidden_dim = 32
    output_dim = 16        # base model's final_linear.out_features

    key = jax.random.PRNGKey(0)
    k_init, k_ctrl, k_static, k_params = jax.random.split(key, 4)
    params = init_params(k_params, initial_dim, seq, control_dim,
                         feat_dim, static_dim, hidden_dim, output_dim)

    # ---- case 1: small batch (single grid step), f32 MXU inputs: tight check ----
    B = 8
    initial = jax.random.normal(k_init, (B, initial_dim), jnp.float32)
    controls = jax.random.normal(k_ctrl, (B, seq, control_dim), jnp.float32)
    static = jax.random.normal(k_static, (B, static_dim), jnp.float32)

    prepped_f32 = prepare_params(params, compute_dtype=jnp.float32)
    out = static_data_network(initial, controls, static, prepped_f32, tile_b=2048)
    out = jax.block_until_ready(out)
    ref = _reference(initial, controls, static, params)
    assert out.shape == (B, output_dim)
    assert jnp.allclose(out, ref, atol=1e-4, rtol=1e-4), "f32 Pallas output mismatch vs reference"

    # ---- case 2: ragged batch, multi-step grid, default bf16 MXU inputs (f32 accumulate) ----
    B2 = 200                                            # clamps tile to 104 -> 2 grid steps
    k_i2, k_c2, k_s2 = jax.random.split(jax.random.PRNGKey(1), 3)
    initial2 = jax.random.normal(k_i2, (B2, initial_dim), jnp.float32)
    controls2 = jax.random.normal(k_c2, (B2, seq, control_dim), jnp.float32)
    static2 = jax.random.normal(k_s2, (B2, static_dim), jnp.float32)

    prepped_bf16 = prepare_params(params, compute_dtype=jnp.bfloat16)
    out2 = static_data_network(initial2, controls2, static2, prepped_bf16, tile_b=2048)
    out2 = jax.block_until_ready(out2)
    ref2 = _reference(initial2, controls2, static2, params)
    assert out2.shape == (B2, output_dim)
    assert jnp.allclose(out2, ref2, atol=5e-2, rtol=5e-2), "bf16 Pallas output mismatch vs reference"

    print("KERNEL_OK")
</pallas_src>

<mosaic_0001>
module attributes {stable_mosaic.version = 11 : i64} {
  func.func @_static_net_kernel(%arg0: i32, %arg1: memref<8x56xf32, #tpu.memory_space<vmem>>, %arg2: memref<48x128xf32, #tpu.memory_space<vmem>>, %arg3: memref<1x128xf32, #tpu.memory_space<vmem>>, %arg4: memref<128x128xf32, #tpu.memory_space<vmem>>, %arg5: memref<8x128xf32, #tpu.memory_space<vmem>>, %arg6: memref<1x128xf32, #tpu.memory_space<vmem>>, %arg7: memref<128x128xf32, #tpu.memory_space<vmem>>, %arg8: memref<1x128xf32, #tpu.memory_space<vmem>>, %arg9: memref<128x128xf32, #tpu.memory_space<vmem>>, %arg10: memref<1x128xf32, #tpu.memory_space<vmem>>, %arg11: memref<128x16xf32, #tpu.memory_space<vmem>>, %arg12: memref<1x16xf32, #tpu.memory_space<vmem>>, %arg13: memref<8x16xf32, #tpu.memory_space<vmem>>) attributes {dimension_semantics = [#tpu.dimension_semantics<parallel>], iteration_bounds = array<i64: 1>, scalar_prefetch = 0 : i64, scratch_operands = 0 : i64, tpu.core_type = #tpu.core_type<tc>, window_params = [{transform_indices = @transform_0, window_bounds = array<i64: 8, 56>}, {pipeline_mode = #tpu.pipeline_mode<synchronous>, transform_indices = @transform_1, window_bounds = array<i64: 48, 128>}, {pipeline_mode = #tpu.pipeline_mode<synchronous>, transform_indices = @transform_2, window_bounds = array<i64: 1, 128>}, {pipeline_mode = #tpu.pipeline_mode<synchronous>, transform_indices = @transform_3, window_bounds = array<i64: 128, 128>}, {pipeline_mode = #tpu.pipeline_mode<synchronous>, transform_indices = @transform_4, window_bounds = array<i64: 8, 128>}, {pipeline_mode = #tpu.pipeline_mode<synchronous>, transform_indices = @transform_5, window_bounds = array<i64: 1, 128>}, {pipeline_mode = #tpu.pipeline_mode<synchronous>, transform_indices = @transform_6, window_bounds = array<i64: 128, 128>}, {pipeline_mode = #tpu.pipeline_mode<synchronous>, transform_indices = @transform_7, window_bounds = array<i64: 1, 128>}, {pipeline_mode = #tpu.pipeline_mode<synchronous>, transform_indices = @transform_8, window_bounds = array<i64: 128, 128>}, {pipeline_mode = #tpu.pipeline_mode<synchronous>, transform_indices = @transform_9, window_bounds = array<i64: 1, 128>}, {pipeline_mode = #tpu.pipeline_mode<synchronous>, transform_indices = @transform_10, window_bounds = array<i64: 128, 16>}, {pipeline_mode = #tpu.pipeline_mode<synchronous>, transform_indices = @transform_11, window_bounds = array<i64: 1, 16>}, {transform_indices = @transform_12, window_bounds = array<i64: 8, 16>}]} {
    %c0 = arith.constant 0 : index
    %c0_0 = arith.constant 0 : index
    %0 = vector.load %arg1[%c0, %c0_0] : memref<8x56xf32, #tpu.memory_space<vmem>>, vector<8x56xf32>
    %1 = vector.extract_strided_slice %0 {offsets = [0, 0], sizes = [8, 48], strides = [1, 1]} : vector<8x56xf32> to vector<8x48xf32>
    %2 = vector.extract_strided_slice %0 {offsets = [0, 48], sizes = [8, 8], strides = [1, 1]} : vector<8x56xf32> to vector<8x8xf32>
    %c0_1 = arith.constant 0 : index
    %c0_2 = arith.constant 0 : index
    %3 = vector.load %arg2[%c0_1, %c0_2] : memref<48x128xf32, #tpu.memory_space<vmem>>, vector<48x128xf32>
    %cst = arith.constant dense<0.000000e+00> : vector<8x128xf32>
    %4 = tpu.matmul %1, %3, %cst {dimension_numbers = #tpu.dot_dimension_numbers<[1], [0], [0], [1], [0, 0, 1, 1], [], []>} : vector<8x48xf32>, vector<48x128xf32>, vector<8x128xf32> -> vector<8x128xf32>
    %c0_3 = arith.constant 0 : index
    %c0_4 = arith.constant 0 : index
    %5 = vector.load %arg3[%c0_3, %c0_4] : memref<1x128xf32, #tpu.memory_space<vmem>>, vector<1x128xf32>
    %6 = vector.broadcast %5 : vector<1x128xf32> to vector<8x128xf32>
    %7 = arith.addf %4, %6 : vector<8x128xf32>
    %cst_5 = arith.constant 0.000000e+00 : f32
    %8 = vector.broadcast %cst_5 : f32 to vector<8x128xf32>
    %9 = arith.maximumf %7, %8 : vector<8x128xf32>
    %c0_6 = arith.constant 0 : index
    %c0_7 = arith.constant 0 : index
    %10 = vector.load %arg4[%c0_6, %c0_7] : memref<128x128xf32, #tpu.memory_space<vmem>>, vector<128x128xf32>
    %cst_8 = arith.constant dense<0.000000e+00> : vector<8x128xf32>
    %11 = tpu.matmul %9, %10, %cst_8 {dimension_numbers = #tpu.dot_dimension_numbers<[1], [0], [0], [1], [0, 0, 1, 1], [], []>} : vector<8x128xf32>, vector<128x128xf32>, vector<8x128xf32> -> vector<8x128xf32>
    %c0_9 = arith.constant 0 : index
    %c0_10 = arith.constant 0 : index
    %12 = vector.load %arg5[%c0_9, %c0_10] : memref<8x128xf32, #tpu.memory_space<vmem>>, vector<8x128xf32>
    %cst_11 = arith.constant dense<0.000000e+00> : vector<8x128xf32>
    %13 = tpu.matmul %2, %12, %cst_11 {dimension_numbers = #tpu.dot_dimension_numbers<[1], [0], [0], [1], [0, 0, 1, 1], [], []>} : vector<8x8xf32>, vector<8x128xf32>, vector<8x128xf32> -> vector<8x128xf32>
    %14 = arith.addf %11, %13 : vector<8x128xf32>
    %c0_12 = arith.constant 0 : index
    %c0_13 = arith.constant 0 : index
    %15 = vector.load %arg6[%c0_12, %c0_13] : memref<1x128xf32, #tpu.memory_space<vmem>>, vector<1x128xf32>
    %16 = vector.broadcast %15 : vector<1x128xf32> to vector<8x128xf32>
    %17 = arith.addf %14, %16 : vector<8x128xf32>
    %cst_14 = arith.constant 0.000000e+00 : f32
    %18 = vector.broadcast %cst_14 : f32 to vector<8x128xf32>
    %19 = arith.maximumf %17, %18 : vector<8x128xf32>
    %c0_15 = arith.constant 0 : index
    %c0_16 = arith.constant 0 : index
    %20 = vector.load %arg7[%c0_15, %c0_16] : memref<128x128xf32, #tpu.memory_space<vmem>>, vector<128x128xf32>
    %cst_17 = arith.constant dense<0.000000e+00> : vector<8x128xf32>
    %21 = tpu.matmul %19, %20, %cst_17 {dimension_numbers = #tpu.dot_dimension_numbers<[1], [0], [0], [1], [0, 0, 1, 1], [], []>} : vector<8x128xf32>, vector<128x128xf32>, vector<8x128xf32> -> vector<8x128xf32>
    %c0_18 = arith.constant 0 : index
    %c0_19 = arith.constant 0 : index
    %22 = vector.load %arg8[%c0_18, %c0_19] : memref<1x128xf32, #tpu.memory_space<vmem>>, vector<1x128xf32>
    %23 = vector.broadcast %22 : vector<1x128xf32> to vector<8x128xf32>
    %24 = arith.addf %21, %23 : vector<8x128xf32>
    %cst_20 = arith.constant 0.000000e+00 : f32
    %25 = vector.broadcast %cst_20 : f32 to vector<8x128xf32>
    %26 = arith.maximumf %24, %25 : vector<8x128xf32>
    %c0_21 = arith.constant 0 : index
    %c0_22 = arith.constant 0 : index
    %27 = vector.load %arg9[%c0_21, %c0_22] : memref<128x128xf32, #tpu.memory_space<vmem>>, vector<128x128xf32>
    %cst_23 = arith.constant dense<0.000000e+00> : vector<8x128xf32>
    %28 = tpu.matmul %26, %27, %cst_23 {dimension_numbers = #tpu.dot_dimension_numbers<[1], [0], [0], [1], [0, 0, 1, 1], [], []>} : vector<8x128xf32>, vector<128x128xf32>, vector<8x128xf32> -> vector<8x128xf32>
    %c0_24 = arith.constant 0 : index
    %c0_25 = arith.constant 0 : index
    %29 = vector.load %arg10[%c0_24, %c0_25] : memref<1x128xf32, #tpu.memory_space<vmem>>, vector<1x128xf32>
    %30 = vector.broadcast %29 : vector<1x128xf32> to vector<8x128xf32>
    %31 = arith.addf %28, %30 : vector<8x128xf32>
    %cst_26 = arith.constant 0.000000e+00 : f32
    %32 = vector.broadcast %cst_26 : f32 to vector<8x128xf32>
    %33 = arith.maximumf %31, %32 : vector<8x128xf32>
    %c0_27 = arith.constant 0 : index
    %c0_28 = arith.constant 0 : index
    %34 = vector.load %arg11[%c0_27, %c0_28] : memref<128x16xf32, #tpu.memory_space<vmem>>, vector<128x16xf32>
    %cst_29 = arith.constant dense<0.000000e+00> : vector<8x16xf32>
    %35 = tpu.matmul %33, %34, %cst_29 {dimension_numbers = #tpu.dot_dimension_numbers<[1], [0], [0], [1], [0, 0, 1, 1], [], []>} : vector<8x128xf32>, vector<128x16xf32>, vector<8x16xf32> -> vector<8x16xf32>
    %c0_30 = arith.constant 0 : index
    %c0_31 = arith.constant 0 : index
    %36 = vector.load %arg12[%c0_30, %c0_31] : memref<1x16xf32, #tpu.memory_space<vmem>>, vector<1x16xf32>
    %37 = vector.broadcast %36 : vector<1x16xf32> to vector<8x16xf32>
    %38 = arith.addf %35, %37 : vector<8x16xf32>
    %c0_32 = arith.constant 0 : index
    %c0_33 = arith.constant 0 : index
    %39 = vector.load %arg13[%c0_32, %c0_33] : memref<8x16xf32, #tpu.memory_space<vmem>>, vector<8x16xf32>
    tpu.vector_store %arg13[%c0_32, %c0_33], %38 {strides = array<i32>} : memref<8x16xf32, #tpu.memory_space<vmem>>, vector<8x16xf32>,
    return
  }
  func.func @transform_0(%arg0: i32) -> (i32, i32) {
    %c0_i32 = arith.constant 0 : i32
    %c0_i32_0 = arith.constant 0 : i32
    return %arg0, %c0_i32 : i32, i32
  }
  func.func @transform_1(%arg0: i32) -> (i32, i32) {
    %c0_i32 = arith.constant 0 : i32
    %c0_i32_0 = arith.constant 0 : i32
    %c0_i32_1 = arith.constant 0 : i32
    return %c0_i32, %c0_i32_0 : i32, i32
  }
  func.func @transform_2(%arg0: i32) -> (i32, i32) {
    %c0_i32 = arith.constant 0 : i32
    %c0_i32_0 = arith.constant 0 : i32
    %c0_i32_1 = arith.constant 0 : i32
    return %c0_i32, %c0_i32_0 : i32, i32
  }
  func.func @transform_3(%arg0: i32) -> (i32, i32) {
    %c0_i32 = arith.constant 0 : i32
    %c0_i32_0 = arith.constant 0 : i32
    %c0_i32_1 = arith.constant 0 : i32
    return %c0_i32, %c0_i32_0 : i32, i32
  }
  func.func @transform_4(%arg0: i32) -> (i32, i32) {
    %c0_i32 = arith.constant 0 : i32
    %c0_i32_0 = arith.constant 0 : i32
    %c0_i32_1 = arith.constant 0 : i32
    return %c0_i32, %c0_i32_0 : i32, i32
  }
  func.func @transform_5(%arg0: i32) -> (i32, i32) {
    %c0_i32 = arith.constant 0 : i32
    %c0_i32_0 = arith.constant 0 : i32
    %c0_i32_1 = arith.constant 0 : i32
    return %c0_i32, %c0_i32_0 : i32, i32
  }
  func.func @transform_6(%arg0: i32) -> (i32, i32) {
    %c0_i32 = arith.constant 0 : i32
    %c0_i32_0 = arith.constant 0 : i32
    %c0_i32_1 = arith.constant 0 : i32
    return %c0_i32, %c0_i32_0 : i32, i32
  }
  func.func @transform_7(%arg0: i32) -> (i32, i32) {
    %c0_i32 = arith.constant 0 : i32
    %c0_i32_0 = arith.constant 0 : i32
    %c0_i32_1 = arith.constant 0 : i32
    return %c0_i32, %c0_i32_0 : i32, i32
  }
  func.func @transform_8(%arg0: i32) -> (i32, i32) {
    %c0_i32 = arith.constant 0 : i32
    %c0_i32_0 = arith.constant 0 : i32
    %c0_i32_1 = arith.constant 0 : i32
    return %c0_i32, %c0_i32_0 : i32, i32
  }
  func.func @transform_9(%arg0: i32) -> (i32, i32) {
    %c0_i32 = arith.constant 0 : i32
    %c0_i32_0 = arith.constant 0 : i32
    %c0_i32_1 = arith.constant 0 : i32
    return %c0_i32, %c0_i32_0 : i32, i32
  }
  func.func @transform_10(%arg0: i32) -> (i32, i32) {
    %c0_i32 = arith.constant 0 : i32
    %c0_i32_0 = arith.constant 0 : i32
    %c0_i32_1 = arith.constant 0 : i32
    return %c0_i32, %c0_i32_0 : i32, i32
  }
  func.func @transform_11(%arg0: i32) -> (i32, i32) {
    %c0_i32 = arith.constant 0 : i32
    %c0_i32_0 = arith.constant 0 : i32
    %c0_i32_1 = arith.constant 0 : i32
    return %c0_i32, %c0_i32_0 : i32, i32
  }
  func.func @transform_12(%arg0: i32) -> (i32, i32) {
    %c0_i32 = arith.constant 0 : i32
    %c0_i32_0 = arith.constant 0 : i32
    return %arg0, %c0_i32 : i32, i32
  }
}

</mosaic_0001>

<llo_original>
// kernel: static_data_network.1
$region0: #{static_data_network.1}
  #allocation0 [shape = 'u32[]', space=smem, size = 0x4, offset = 0x4, fixed_abs, tag = 'smem constant byte address 0x4 - core index']
  #allocation1 [shape = 'u32[72,128]{1,0:T(1,128)}', space=vmem, size = 0x9000, scoped, tag = 'internal scratch']
  %s0 = inlined_call_operand.vmem [shape: f32[8,56], index: 0, kind: input, shape index: {}]
  %s1 = inlined_call_operand.vmem [shape: f32[48,128], index: 1, kind: input, shape index: {}]
  %s2 = inlined_call_operand.vmem [shape: f32[1,128], index: 2, kind: input, shape index: {}]
  %s3 = inlined_call_operand.vmem [shape: f32[128,128], index: 3, kind: input, shape index: {}]
  %s4 = inlined_call_operand.vmem [shape: f32[8,128], index: 4, kind: input, shape index: {}]
  %s5 = inlined_call_operand.vmem [shape: f32[1,128], index: 5, kind: input, shape index: {}]
  %s6 = inlined_call_operand.hbm [shape: f32[128,128], index: 6, kind: input, shape index: {}]
  %s7 = inlined_call_operand.vmem [shape: f32[1,128], index: 7, kind: input, shape index: {}]
  %s8 = inlined_call_operand.hbm [shape: f32[128,128], index: 8, kind: input, shape index: {}]
  %s9 = inlined_call_operand.vmem [shape: f32[1,128], index: 9, kind: input, shape index: {}]
  %s10 = inlined_call_operand.vmem [shape: f32[128,16], index: 10, kind: input, shape index: {}]
  %s11 = inlined_call_operand.vmem [shape: f32[1,16], index: 11, kind: input, shape index: {}]
  %s12 = inlined_call_operand.hbm [shape: f32[8,16], index: 12, kind: output, shape index: {}]
  %s13 = sld [smem:[#allocation0]]
  $region66: #{static_data_network.1} parent=0
    _
  %s15 = ssub.s32 1, %s13
  %s16 = scalar_select 0, %s15, %s13
  $region1: #{static_data_network.1} parent=0
    #allocation2 [shape = 'u8[65536]{0}', space=vmem, size = 0x10000, scoped, tag = 'input window, operand 6, single buffered']
    #allocation3 [shape = 's32[1]{0}', space=sflag, size = 0x4, scoped, tag = 'scoped memory for static_data_network.1']
    #allocation4 [shape = 's32[1]{0}', space=sflag, size = 0x4, scoped, tag = 'scoped memory for static_data_network.1']
    #allocation5 [shape = 'u8[65536]{0}', space=vmem, size = 0x10000, scoped, tag = 'input window, operand 8, single buffered']
    #allocation6 [shape = 's32[1]{0}', space=sflag, size = 0x4, scoped, tag = 'scoped memory for static_data_network.1']
    #allocation7 [shape = 'u8[4096]{0}', space=vmem, size = 0x1000, scoped, tag = 'output window, operand 0, single buffered']
    %17 = vsyncpa [#allocation3], 0
    %18 = vsyncpa [#allocation6], 0
    %19 = vsyncpa [#allocation4], 0
    // Predicated region
    $region2: #{static_data_network.1} parent=1 // pred_check
      _
    $region3: #{static_data_network.1} parent=1 // pred_check_branch
      %21 = sbr.rel (0) target = $region5
    $region4: #{static_data_network.1} parent=1 // pred_region
      _
    $region5: #{static_data_network.1} parent=1 // pred_fallthru
      _
    // Predicated region
    $region6: #{static_data_network.1} parent=1 // pred_check
      _
    $region7: #{static_data_network.1} parent=1 // pred_check_branch
      %23 = sbr.rel (0) target = $region9
    $region8: #{static_data_network.1} parent=1 // pred_region
      _
    $region9: #{static_data_network.1} parent=1 // pred_fallthru
      _
    // Predicated region
    $region10: #{static_data_network.1} parent=1 // pred_check
      _
    $region11: #{static_data_network.1} parent=1 // pred_check_branch
      %25 = sbr.rel (0) target = $region13
    $region12: #{static_data_network.1} parent=1 // pred_region
      _
    $region13: #{static_data_network.1} parent=1 // pred_fallthru
      _
    // Predicated region
    $region14: #{static_data_network.1} parent=1 // pred_check
      _
    $region15: #{static_data_network.1} parent=1 // pred_check_branch
      %27 = sbr.rel (0) target = $region17
    $region16: #{static_data_network.1} parent=1 // pred_region
      _
    $region17: #{static_data_network.1} parent=1 // pred_fallthru
      _
    // Predicated region
    $region18: #{static_data_network.1} parent=1 // pred_check
      _
    $region19: #{static_data_network.1} parent=1 // pred_check_branch
      %29 = sbr.rel (0) target = $region21
    $region20: #{static_data_network.1} parent=1 // pred_region
      _
    $region21: #{static_data_network.1} parent=1 // pred_fallthru
      _
    // Predicated region
    $region22: #{static_data_network.1} parent=1 // pred_check
      _
    $region23: #{static_data_network.1} parent=1 // pred_check_branch
      %31 = sbr.rel (0) target = $region25
    $region24: #{static_data_network.1} parent=1 // pred_region
      _
    $region25: #{static_data_network.1} parent=1 // pred_fallthru
      _
    // Predicated region
    $region26: #{static_data_network.1} parent=1 // pred_check
      _
    $region27: #{static_data_network.1} parent=1 // pred_check_branch
      %33 = sbr.rel (0) target = $region29
    $region28: #{static_data_network.1} parent=1 // pred_region
      %35 = vsyncadd [#allocation3], 0
      %s36 = sshll.u32 %s6, 4
      %s37 = int_to_ptr.hbm [resolvable:$true] %s36
      %s38 = sshll.u32 [#allocation2], 4
      %s39 = int_to_ptr.vmem [resolvable:$true] %s38
      %44 = dma.hbm_to_vmem [thread:$0]  %s37, 2048, %s39, [#allocation3], 128, 128, 8
    $region29: #{static_data_network.1} parent=1 // pred_fallthru
      _
    // Predicated region
    $region30: #{static_data_network.1} parent=1 // pred_check
      _
    $region31: #{static_data_network.1} parent=1 // pred_check_branch
      %46 = sbr.rel (0) target = $region33
    $region32: #{static_data_network.1} parent=1 // pred_region
      _
    $region33: #{static_data_network.1} parent=1 // pred_fallthru
      _
    // Predicated region
    $region34: #{static_data_network.1} parent=1 // pred_check
      _
    $region35: #{static_data_network.1} parent=1 // pred_check_branch
      %48 = sbr.rel (0) target = $region37
    $region36: #{static_data_network.1} parent=1 // pred_region
      %50 = vsyncadd [#allocation6], 0
      %s51 = sshll.u32 %s8, 4
      %s52 = int_to_ptr.hbm [resolvable:$true] %s51
      %s53 = sshll.u32 [#allocation5], 4
      %s54 = int_to_ptr.vmem [resolvable:$true] %s53
      %59 = dma.hbm_to_vmem [thread:$0]  %s52, 2048, %s54, [#allocation6], 128, 128, 8
    $region37: #{static_data_network.1} parent=1 // pred_fallthru
      _
    // Predicated region
    $region38: #{static_data_network.1} parent=1 // pred_check
      _
    $region39: #{static_data_network.1} parent=1 // pred_check_branch
      %61 = sbr.rel (0) target = $region41
    $region40: #{static_data_network.1} parent=1 // pred_region
      _
    $region41: #{static_data_network.1} parent=1 // pred_fallthru
      _
    // Predicated region
    $region42: #{static_data_network.1} parent=1 // pred_check
      _
    $region43: #{static_data_network.1} parent=1 // pred_check_branch
      %63 = sbr.rel (0) target = $region45
    $region44: #{static_data_network.1} parent=1 // pred_region
      _
    $region45: #{static_data_network.1} parent=1 // pred_fallthru
      _
    // Predicated region
    $region46: #{static_data_network.1} parent=1 // pred_check
      _
    $region47: #{static_data_network.1} parent=1 // pred_check_branch
      %65 = sbr.rel (0) target = $region49
    $region48: #{static_data_network.1} parent=1 // pred_region
      _
    $region49: #{static_data_network.1} parent=1 // pred_fallthru
      _
    // Predicated region
    $region50: #{static_data_network.1} parent=1 // pred_check
      _
    $region51: #{static_data_network.1} parent=1 // pred_check_branch
      %67 = sbr.rel (0) target = $region53
    $region52: #{static_data_network.1} parent=1 // pred_region
      %69 = dma.done [#allocation3], 2048
    $region53: #{static_data_network.1} parent=1 // pred_fallthru
      _
    // Predicated region
    $region54: #{static_data_network.1} parent=1 // pred_check
      _
    $region55: #{static_data_network.1} parent=1 // pred_check_branch
      %71 = sbr.rel (0) target = $region57
    $region56: #{static_data_network.1} parent=1 // pred_region
      %73 = dma.done [#allocation6], 2048
    $region57: #{static_data_network.1} parent=1 // pred_fallthru
      _
    %v74 = vld [vmem:[%s0] sm:$0xff]
    %v75 = vld [vmem:[%s1] sm:$0xff]
    %v76 = vld [vmem:[%s1 + $0x8] sm:$0xff]
    %v77 = vld [vmem:[%s1 + $0x10] sm:$0xff]
    %v78 = vld [vmem:[%s1 + $0x18] sm:$0xff]
    %v79 = vld [vmem:[%s1 + $0x20] sm:$0xff]
    %v80 = vld [vmem:[%s1 + $0x28] sm:$0xff]
    %v81 = vld [vmem:[%s2] sm:$0x1]
    %v83 = vperm.slane %v81, 0
    %vm85 = vcmask 392192
    %v87 = vsel %vm85, %v74, 0
    %89 = vmatpush.msra.mxu0 0.0
    %90 = vmatpush.msra.mxu0 0.0
    %91 = vmatpush.msra.mxu0 0.0
    %92 = vmatpush.msra.mxu0 0.0
    %93 = vmatpush.msra.mxu0 0.0
    %94 = vmatpush.msra.mxu0 0.0
    %95 = vmatpush.msra.mxu0 0.0
    %96 = vmatpush.msra.mxu0 0.0
    %97 = vmatpush.msra.mxu0 0.0
    %98 = vmatpush.msra.mxu0 0.0
    %99 = vmatpush.msra.mxu0 %v80
    %100 = vmatpush.msra.mxu0 %v79
    %101 = vmatpush.msra.mxu0 %v78
    %102 = vmatpush.msra.mxu0 %v77
    %103 = vmatpush.msra.mxu0 %v76
    %104 = vmatpush.msra.mxu0 %v75
    %105 = vmatmul.f32.gmra.mxu0 %v87
    %v106 = vpop.f32.mrf.mxu0
    %v107 = vadd.f32 %v83, %v106
    %108 = vdwg.mxu0
    %v109 = vmax.f32 %v107, 0.0
    %v110 = vld [vmem:[%s3] sm:$0xff]
    %v111 = vld [vmem:[%s3 + $0x8] sm:$0xff]
    %v112 = vld [vmem:[%s3 + $0x10] sm:$0xff]
    %v113 = vld [vmem:[%s3 + $0x18] sm:$0xff]
    %v114 = vld [vmem:[%s3 + $0x20] sm:$0xff]
    %v115 = vld [vmem:[%s3 + $0x28] sm:$0xff]
    %v116 = vld [vmem:[%s3 + $0x30] sm:$0xff]
    %v117 = vld [vmem:[%s3 + $0x38] sm:$0xff]
    %v118 = vld [vmem:[%s3 + $0x40] sm:$0xff]
    %v119 = vld [vmem:[%s3 + $0x48] sm:$0xff]
    %v120 = vld [vmem:[%s3 + $0x50] sm:$0xff]
    %v121 = vld [vmem:[%s3 + $0x58] sm:$0xff]
    %v122 = vld [vmem:[%s3 + $0x60] sm:$0xff]
    %v123 = vld [vmem:[%s3 + $0x68] sm:$0xff]
    %v124 = vld [vmem:[%s3 + $0x70] sm:$0xff]
    %v125 = vld [vmem:[%s3 + $0x78] sm:$0xff]
    %v126 = vld [vmem:[%s4] sm:$0xff]
    %127 = vrot.lane.b32.xlu0 %v74, 80
    %v128 = vpop.permute.xlu0 %127
    %vm129 = vcmask 64512
    %v130 = vsel %vm129, %v128, 0
    %132 = vmatpush.msra.mxu0 0.0
    %133 = vmatpush.msra.mxu0 0.0
    %134 = vmatpush.msra.mxu0 0.0
    %135 = vmatpush.msra.mxu0 0.0
    %136 = vmatpush.msra.mxu0 0.0
    %137 = vmatpush.msra.mxu0 0.0
    %138 = vmatpush.msra.mxu0 0.0
    %139 = vmatpush.msra.mxu0 0.0
    %140 = vmatpush.msra.mxu0 0.0
    %141 = vmatpush.msra.mxu0 0.0
    %142 = vmatpush.msra.mxu0 0.0
    %143 = vmatpush.msra.mxu0 0.0
    %144 = vmatpush.msra.mxu0 0.0
    %145 = vmatpush.msra.mxu0 0.0
    %146 = vmatpush.msra.mxu0 0.0
    %147 = vmatpush.msra.mxu0 %v126
    %148 = vmatmul.f32.gmra.mxu0 %v130
    %v149 = vpop.f32.mrf.mxu0
    %v150 = vadd.f32 0.0, %v149
    %151 = vdwg.mxu0
    %152 = vmatpush.msra.mxu0 %v125
    %153 = vmatpush.msra.mxu0 %v124
    %154 = vmatpush.msra.mxu0 %v123
    %155 = vmatpush.msra.mxu0 %v122
    %156 = vmatpush.msra.mxu0 %v121
    %157 = vmatpush.msra.mxu0 %v120
    %158 = vmatpush.msra.mxu0 %v119
    %159 = vmatpush.msra.mxu0 %v118
    %160 = vmatpush.msra.mxu0 %v117
    %161 = vmatpush.msra.mxu0 %v116
    %162 = vmatpush.msra.mxu0 %v115
    %163 = vmatpush.msra.mxu0 %v114
    %164 = vmatpush.msra.mxu0 %v113
    %165 = vmatpush.msra.mxu0 %v112
    %166 = vmatpush.msra.mxu0 %v111
    %167 = vmatpush.msra.mxu0 %v110
    %168 = vmatmul.f32.gmra.mxu0 %v109
    %v169 = vpop.f32.mrf.mxu0
    %v170 = vadd.f32 %v150, %v169
    %171 = vdwg.mxu0
    %v172 = vld [vmem:[%s5] sm:$0x1]
    %v174 = vperm.slane %v172, 0
    %v176 = vadd.f32 %v170, %v174
    %v177 = vmax.f32 %v176, 0.0
    %v178 = vld [vmem:[#allocation2] sm:$0xff]
    %v179 = vld [vmem:[#allocation2 + $0x8] sm:$0xff]
    %v180 = vld [vmem:[#allocation2 + $0x10] sm:$0xff]
    %v181 = vld [vmem:[#allocation2 + $0x18] sm:$0xff]
    %v182 = vld [vmem:[#allocation2 + $0x20] sm:$0xff]
    %v183 = vld [vmem:[#allocation2 + $0x28] sm:$0xff]
    %v184 = vld [vmem:[#allocation2 + $0x30] sm:$0xff]
    %v185 = vld [vmem:[#allocation2 + $0x38] sm:$0xff]
    %v186 = vld [vmem:[#allocation2 + $0x40] sm:$0xff]
    %v187 = vld [vmem:[#allocation2 + $0x48] sm:$0xff]
    %v188 = vld [vmem:[#allocation2 + $0x50] sm:$0xff]
    %v189 = vld [vmem:[#allocation2 + $0x58] sm:$0xff]
    %v190 = vld [vmem:[#allocation2 + $0x60] sm:$0xff]
    %v191 = vld [vmem:[#allocation2 + $0x68] sm:$0xff]
    %v192 = vld [vmem:[#allocation2 + $0x70] sm:$0xff]
    %v193 = vld [vmem:[#allocation2 + $0x78] sm:$0xff]
    %v194 = vld [vmem:[%s7] sm:$0x1]
    %v196 = vperm.slane %v194, 0
    %198 = vmatpush.msra.mxu0 %v193
    %199 = vmatpush.msra.mxu0 %v192
    %200 = vmatpush.msra.mxu0 %v191
    %201 = vmatpush.msra.mxu0 %v190
    %202 = vmatpush.msra.mxu0 %v189
    %203 = vmatpush.msra.mxu0 %v188
    %204 = vmatpush.msra.mxu0 %v187
    %205 = vmatpush.msra.mxu0 %v186
    %206 = vmatpush.msra.mxu0 %v185
    %207 = vmatpush.msra.mxu0 %v184
    %208 = vmatpush.msra.mxu0 %v183
    %209 = vmatpush.msra.mxu0 %v182
    %210 = vmatpush.msra.mxu0 %v181
    %211 = vmatpush.msra.mxu0 %v180
    %212 = vmatpush.msra.mxu0 %v179
    %213 = vmatpush.msra.mxu0 %v178
    %214 = vmatmul.f32.gmra.mxu0 %v177
    %v215 = vpop.f32.mrf.mxu0
    %v216 = vadd.f32 %v196, %v215
    %217 = vdwg.mxu0
    %v218 = vmax.f32 %v216, 0.0
    %v219 = vld [vmem:[#allocation5] sm:$0xff]
    %v220 = vld [vmem:[#allocation5 + $0x8] sm:$0xff]
    %v221 = vld [vmem:[#allocation5 + $0x10] sm:$0xff]
    %v222 = vld [vmem:[#allocation5 + $0x18] sm:$0xff]
    %v223 = vld [vmem:[#allocation5 + $0x20] sm:$0xff]
    %v224 = vld [vmem:[#allocation5 + $0x28] sm:$0xff]
    %v225 = vld [vmem:[#allocation5 + $0x30] sm:$0xff]
    %v226 = vld [vmem:[#allocation5 + $0x38] sm:$0xff]
    %v227 = vld [vmem:[#allocation5 + $0x40] sm:$0xff]
    %v228 = vld [vmem:[#allocation5 + $0x48] sm:$0xff]
    %v229 = vld [vmem:[#allocation5 + $0x50] sm:$0xff]
    %v230 = vld [vmem:[#allocation5 + $0x58] sm:$0xff]
    %v231 = vld [vmem:[#allocation5 + $0x60] sm:$0xff]
    %v232 = vld [vmem:[#allocation5 + $0x68] sm:$0xff]
    %v233 = vld [vmem:[#allocation5 + $0x70] sm:$0xff]
    %v234 = vld [vmem:[#allocation5 + $0x78] sm:$0xff]
    %v235 = vld [vmem:[%s9] sm:$0x1]
    %v237 = vperm.slane %v235, 0
    %239 = vmatpush.msra.mxu0 %v234
    %240 = vmatpush.msra.mxu0 %v233
    %241 = vmatpush.msra.mxu0 %v232
    %242 = vmatpush.msra.mxu0 %v231
    %243 = vmatpush.msra.mxu0 %v230
    %244 = vmatpush.msra.mxu0 %v229
    %245 = vmatpush.msra.mxu0 %v228
    %246 = vmatpush.msra.mxu0 %v227
    %247 = vmatpush.msra.mxu0 %v226
    %248 = vmatpush.msra.mxu0 %v225
    %249 = vmatpush.msra.mxu0 %v224
    %250 = vmatpush.msra.mxu0 %v223
    %251 = vmatpush.msra.mxu0 %v222
    %252 = vmatpush.msra.mxu0 %v221
    %253 = vmatpush.msra.mxu0 %v220
    %254 = vmatpush.msra.mxu0 %v219
    %255 = vmatmul.f32.gmra.mxu0 %v218
    %v256 = vpop.f32.mrf.mxu0
    %v257 = vadd.f32 %v237, %v256
    %258 = vdwg.mxu0
    %v259 = vmax.f32 %v257, 0.0
    %v260 = vld [vmem:[%s10] sm:$0xff]
    %v261 = vld [vmem:[%s10 + $0x8] sm:$0xff]
    %v262 = vld [vmem:[%s10 + $0x10] sm:$0xff]
    %v263 = vld [vmem:[%s10 + $0x18] sm:$0xff]
    %v264 = vld [vmem:[%s10 + $0x20] sm:$0xff]
    %v265 = vld [vmem:[%s10 + $0x28] sm:$0xff]
    %v266 = vld [vmem:[%s10 + $0x30] sm:$0xff]
    %v267 = vld [vmem:[%s10 + $0x38] sm:$0xff]
    %v268 = vld [vmem:[%s10 + $0x40] sm:$0xff]
    %v269 = vld [vmem:[%s10 + $0x48] sm:$0xff]
    %v270 = vld [vmem:[%s10 + $0x50] sm:$0xff]
    %v271 = vld [vmem:[%s10 + $0x58] sm:$0xff]
    %v272 = vld [vmem:[%s10 + $0x60] sm:$0xff]
    %v273 = vld [vmem:[%s10 + $0x68] sm:$0xff]
    %v274 = vld [vmem:[%s10 + $0x70] sm:$0xff]
    %v275 = vld [vmem:[%s10 + $0x78] sm:$0xff]
    %v276 = vld [vmem:[%s11] sm:$0x1]
    %v278 = vperm.slane %v276, 0
    %280 = vmatpush.msra.mxu0 %v275
    %281 = vmatpush.msra.mxu0 %v274
    %282 = vmatpush.msra.mxu0 %v273
    %283 = vmatpush.msra.mxu0 %v272
    %284 = vmatpush.msra.mxu0 %v271
    %285 = vmatpush.msra.mxu0 %v270
    %286 = vmatpush.msra.mxu0 %v269
    %287 = vmatpush.msra.mxu0 %v268
    %288 = vmatpush.msra.mxu0 %v267
    %289 = vmatpush.msra.mxu0 %v266
    %290 = vmatpush.msra.mxu0 %v265
    %291 = vmatpush.msra.mxu0 %v264
    %292 = vmatpush.msra.mxu0 %v263
    %293 = vmatpush.msra.mxu0 %v262
    %294 = vmatpush.msra.mxu0 %v261
    %295 = vmatpush.msra.mxu0 %v260
    %296 = vmatmul.f32.gmra.mxu0 %v259
    %v297 = vpop.f32.mrf.mxu0
    %v298 = vadd.f32 %v278, %v297
    %299 = vdwg.mxu0
    %vm300 = vcmask 130048
    %301 = vst.msk [vmem:[#allocation7] sm:$0xff] %vm300, %v298
    // Predicated region
    $region58: #{static_data_network.1} parent=1 // pred_check
      _
    $region59: #{static_data_network.1} parent=1 // pred_check_branch
      %303 = sbr.rel (0) target = $region61
    $region60: #{static_data_network.1} parent=1 // pred_region
      %305 = vsyncadd [#allocation4], 0
      %s307 = sshll.u32 [#allocation7], 4
      %s308 = int_to_ptr.vmem [resolvable:$true] %s307
      %s309 = sshll.u32 %s12, 4
      %s310 = int_to_ptr.hbm [resolvable:$true] %s309
      %312 = dma.vmem_to_hbm [thread:$0]  %s308, 128, %s310, [#allocation4]
    $region61: #{static_data_network.1} parent=1 // pred_fallthru
      _
    // Predicated region
    $region62: #{static_data_network.1} parent=1 // pred_check
      _
    $region63: #{static_data_network.1} parent=1 // pred_check_branch
      %314 = sbr.rel (0) target = $region65
    $region64: #{static_data_network.1} parent=1 // pred_region
      %316 = dma.done [#allocation4], 128
    $region65: #{static_data_network.1} parent=1 // pred_fallthru
      _
    %317 = vsyncpa [#allocation3], 1
    %318 = vsyncpa [#allocation6], 1
    %319 = vsyncpa [#allocation4], 1

</llo_original>
